<compile_context>
chip_gen: v5e
topology: v5e:2x2
jax: 0.10.0
libtpu: 0.0.40
codegen_flags: <defaults>
</compile_context>

<pallas_src>
import functools
import jax
import jax.numpy as jnp
from jax.experimental import pallas as pl
from jax.experimental.pallas import tpu as pltpu


def _conv_snn_kernel(p_ref, w_ref, thr_ref, out_ref, *, Nb, HoWo, Kdim, Cout):
    # p_ref  : (Nb, 4*HoWo, Kdim) bf16  im2col patches, rows ordered (phase, i, j)
    # w_ref  : (Kdim, Cout)       bf16  conv weight, K ordered (ki, kj, cin)
    # thr_ref: (1, Cout)          f32   per-channel threshold = tau*v_th - bias
    # out_ref: (Nb, 1, HoWo*Cout) f32   lane-dense pooled spikes
    patches = p_ref[...].reshape(Nb * 4 * HoWo, Kdim)          # leading-dim merge, free
    # conv2d as a single MXU contraction (bf16 x bf16 -> f32 accumulation)
    acc = jnp.dot(patches, w_ref[...],
                  preferred_element_type=jnp.float32)          # (Nb*4*HoWo, Cout)

    # MaxPool2d(2,2): the four positions of each 2x2 window live in four
    # contiguous HoWo-row groups ("phases") -> elementwise max over a leading
    # axis, no lane/sublane shuffles.  Pool before threshold (equivalent since
    # the threshold is per-channel and monotone).
    a = acc.reshape(Nb, 4, HoWo, Cout)
    pooled = jnp.maximum(jnp.maximum(a[:, 0], a[:, 1]),
                         jnp.maximum(a[:, 2], a[:, 3]))        # (Nb, HoWo, Cout)

    # LIF (fresh state, decay_input=True, v_reset=0): spike = (x/tau >= v_th)
    #   == (x >= tau*v_th - b); bias and 1/tau folded into thr in the wrapper.
    spike = (pooled >= thr_ref[0]).astype(jnp.float32)

    # TrainingHook: identity in the forward pass.

    out_ref[...] = spike.reshape(Nb, 1, HoWo * Cout)           # 512-lane dense store


def _pick_batch_block(N, rows_per_image, max_rows=4096):
    """Largest divisor Nb of N keeping per-step matmul M <= max_rows and (when
    N >= 2) at least 2 grid steps so both v7x TensorCores get work."""
    best = 1
    for nb in range(1, N + 1):
        if N % nb != 0:
            continue
        if nb * rows_per_image > max_rows:
            continue
        if N >= 2 and N // nb < 2:
            continue
        best = nb
    return best


def conv_snn_block(x_nchw, w, b, labels=None, y=None, *,
                   tau=2.0, v_th=1.0, padding=1, batch_block=None):
    """Forward of Conv_SNN_block.

    x_nchw: (N, Cin, H, W) f32; w: (KH, KW, Cin, Cout); b: (Cout,).
    labels / y only feed the backward-only TrainingHook -> ignored in forward.
    """
    N, Cin, H, W = x_nchw.shape
    KH, KW, _, Cout = w.shape
    assert H % 2 == 0 and W % 2 == 0, "MaxPool2d(2,2) with odd H/W not supported"
    assert KH == 2 * padding + 1 and KW == 2 * padding + 1, "only 'same' conv geometry"
    Ho, Wo = H // 2, W // 2
    HoWo = Ho * Wo
    Kdim = KH * KW * Cin

    # ---- wrapper-side layout plumbing (bf16 inputs; f32 accumulation in kernel) ----
    x_nhwc = jnp.transpose(x_nchw.astype(jnp.bfloat16), (0, 2, 3, 1))
    xp = jnp.pad(x_nhwc, ((0, 0), (padding, padding), (padding, padding), (0, 0)))

    # phase-major im2col: rows ordered (pool-phase p,q | pooled i,j); K ordered (ki,kj,cin)
    cols = []
    for p in range(2):
        for q in range(2):
            taps = [xp[:, p + ki:p + ki + 2 * Ho:2, q + kj:q + kj + 2 * Wo:2, :]
                    for ki in range(KH) for kj in range(KW)]
            cols.append(jnp.concatenate(taps, axis=-1))        # (N, Ho, Wo, Kdim)
    patches = jnp.stack(cols, axis=1).reshape(N, 4 * HoWo, Kdim)

    w2 = w.reshape(Kdim, Cout).astype(jnp.bfloat16)
    thr = (tau * v_th - b.astype(jnp.float32)).reshape(1, Cout)   # folds bias + 1/tau

    Nb = batch_block or _pick_batch_block(N, 4 * HoWo)
    assert N % Nb == 0
    grid = (N // Nb,)

    kern = functools.partial(_conv_snn_kernel, Nb=Nb, HoWo=HoWo, Kdim=Kdim, Cout=Cout)

    out = pl.pallas_call(
        kern,
        out_shape=jax.ShapeDtypeStruct((N, 1, HoWo * Cout), jnp.float32),
        grid_spec=pltpu.PrefetchScalarGridSpec(
            num_scalar_prefetch=0,
            grid=grid,
            in_specs=[
                pl.BlockSpec((Nb, 4 * HoWo, Kdim), lambda n: (n, 0, 0)),
                pl.BlockSpec((Kdim, Cout), lambda n: (0, 0)),
                pl.BlockSpec((1, Cout), lambda n: (0, 0)),
            ],
            out_specs=pl.BlockSpec((Nb, 1, HoWo * Cout), lambda n: (n, 0, 0)),
        ),
        compiler_params=pltpu.CompilerParams(
            dimension_semantics=("parallel",)),
    )(patches, w2, thr)

    # lane-dense slab -> PyTorch NCHW convention
    return jnp.transpose(out.reshape(N, Ho, Wo, Cout), (0, 3, 1, 2))


def _reference(x_nchw, w, b, tau, v_th):
    """Pure-JAX reference matching PyTorch semantics."""
    w_oihw = jnp.transpose(w, (3, 2, 0, 1))
    yv = jax.lax.conv_general_dilated(x_nchw, w_oihw, window_strides=(1, 1),
                                      padding=((1, 1), (1, 1)))
    yv = yv + b[None, :, None, None]
    spike = (yv / tau >= v_th).astype(jnp.float32)
    N, C, H, W = spike.shape
    s = spike.reshape(N, C, H // 2, 2, W // 2, 2)
    return s.max(axis=(3, 5))


if __name__ == "__main__":
    key = jax.random.PRNGKey(0)
    N, Cin, Cout, H, W, K = 2, 4, 8, 16, 16, 3
    tau, v_th = 2.0, 1.0

    kx, kw, kb, kl = jax.random.split(key, 4)
    x = jax.random.normal(kx, (N, Cin, H, W), jnp.float32)
    w = jax.random.uniform(kw, (K, K, Cin, Cout), jnp.float32, -0.5, 0.5)
    b = jax.random.uniform(kb, (Cout,), jnp.float32, -0.5, 0.5)
    labels = jax.random.randint(kl, (N,), 0, 10)   # unused in forward (hook is bwd-only)
    y = jnp.zeros((N, 10), jnp.float32)            # unused in forward

    out = conv_snn_block(x, w, b, labels, y, tau=tau, v_th=v_th)
    out = jax.block_until_ready(out)
    assert out.shape == (N, Cout, H // 2, W // 2), out.shape

    # main check: reference with bf16-rounded inputs (kernel uses bf16 x bf16 -> f32 MXU)
    xr = x.astype(jnp.bfloat16).astype(jnp.float32)
    wr = w.astype(jnp.bfloat16).astype(jnp.float32)
    ref_bf16 = _reference(xr, wr, b, tau, v_th)
    frac = float(jnp.mean(jnp.abs(out - ref_bf16) > 0.5))
    assert frac < 0.01, f"mismatch fraction vs bf16-faithful reference = {frac}"

    # sanity vs pure-f32 reference: bf16 rounding may flip spikes that sit exactly
    # at the LIF threshold; tolerate a small fraction of single-bit flips.
    ref_f32 = _reference(x, w, b, tau, v_th)
    frac32 = float(jnp.mean(jnp.abs(out - ref_f32) > 0.5))
    assert frac32 < 0.05, f"mismatch fraction vs f32 reference = {frac32}"

    print("KERNEL_OK")
</pallas_src>

<mosaic_0001>
module attributes {stable_mosaic.version = 11 : i64} {
  func.func @_conv_snn_kernel(%arg0: i32, %arg1: memref<1x256x36xbf16, #tpu.memory_space<vmem>>, %arg2: memref<36x8xbf16, #tpu.memory_space<vmem>>, %arg3: memref<1x8xf32, #tpu.memory_space<vmem>>, %arg4: memref<1x1x512xf32, #tpu.memory_space<vmem>>) attributes {dimension_semantics = [#tpu.dimension_semantics<parallel>], iteration_bounds = array<i64: 2>, scalar_prefetch = 0 : i64, scratch_operands = 0 : i64, tpu.core_type = #tpu.core_type<tc>, window_params = [{transform_indices = @transform_0, window_bounds = array<i64: 1, 256, 36>}, {pipeline_mode = #tpu.pipeline_mode<synchronous>, transform_indices = @transform_1, window_bounds = array<i64: 36, 8>}, {pipeline_mode = #tpu.pipeline_mode<synchronous>, transform_indices = @transform_2, window_bounds = array<i64: 1, 8>}, {transform_indices = @transform_3, window_bounds = array<i64: 1, 1, 512>}]} {
    %c0 = arith.constant 0 : index
    %c0_0 = arith.constant 0 : index
    %c0_1 = arith.constant 0 : index
    %0 = vector.load %arg1[%c0, %c0_0, %c0_1] : memref<1x256x36xbf16, #tpu.memory_space<vmem>>, vector<1x256x36xbf16>
    %1 = vector.shape_cast %0 : vector<1x256x36xbf16> to vector<256x36xbf16>
    %c0_2 = arith.constant 0 : index
    %c0_3 = arith.constant 0 : index
    %2 = vector.load %arg2[%c0_2, %c0_3] : memref<36x8xbf16, #tpu.memory_space<vmem>>, vector<36x8xbf16>
    %cst = arith.constant dense<0.000000e+00> : vector<256x8xf32>
    %3 = tpu.matmul %1, %2, %cst {dimension_numbers = #tpu.dot_dimension_numbers<[1], [0], [0], [1], [0, 0, 1, 1], [], []>} : vector<256x36xbf16>, vector<36x8xbf16>, vector<256x8xf32> -> vector<256x8xf32>
    %4 = vector.shape_cast %3 : vector<256x8xf32> to vector<1x4x64x8xf32>
    %5 = vector.extract_strided_slice %4 {offsets = [0, 0, 0, 0], sizes = [1, 1, 64, 8], strides = [1, 1, 1, 1]} : vector<1x4x64x8xf32> to vector<1x1x64x8xf32>
    %6 = vector.shape_cast %5 : vector<1x1x64x8xf32> to vector<1x64x8xf32>
    %7 = vector.extract_strided_slice %4 {offsets = [0, 1, 0, 0], sizes = [1, 1, 64, 8], strides = [1, 1, 1, 1]} : vector<1x4x64x8xf32> to vector<1x1x64x8xf32>
    %8 = vector.shape_cast %7 : vector<1x1x64x8xf32> to vector<1x64x8xf32>
    %9 = arith.maximumf %6, %8 : vector<1x64x8xf32>
    %10 = vector.extract_strided_slice %4 {offsets = [0, 2, 0, 0], sizes = [1, 1, 64, 8], strides = [1, 1, 1, 1]} : vector<1x4x64x8xf32> to vector<1x1x64x8xf32>
    %11 = vector.shape_cast %10 : vector<1x1x64x8xf32> to vector<1x64x8xf32>
    %12 = vector.extract_strided_slice %4 {offsets = [0, 3, 0, 0], sizes = [1, 1, 64, 8], strides = [1, 1, 1, 1]} : vector<1x4x64x8xf32> to vector<1x1x64x8xf32>
    %13 = vector.shape_cast %12 : vector<1x1x64x8xf32> to vector<1x64x8xf32>
    %14 = arith.maximumf %11, %13 : vector<1x64x8xf32>
    %15 = arith.maximumf %9, %14 : vector<1x64x8xf32>
    %c0_4 = arith.constant 0 : index
    %c0_5 = arith.constant 0 : index
    %16 = vector.load %arg3[%c0_4, %c0_5] : memref<1x8xf32, #tpu.memory_space<vmem>>, vector<1x8xf32>
    %17 = vector.shape_cast %16 : vector<1x8xf32> to vector<8xf32>
    %18 = vector.shape_cast %17 : vector<8xf32> to vector<1x1x8xf32>
    %19 = vector.broadcast %18 : vector<1x1x8xf32> to vector<1x64x8xf32>
    %20 = arith.cmpf oge, %15, %19 : vector<1x64x8xf32>
    %21 = arith.extui %20 : vector<1x64x8xi1> to vector<1x64x8xi32>
    %22 = arith.sitofp %21 : vector<1x64x8xi32> to vector<1x64x8xf32>
    %23 = vector.shape_cast %22 : vector<1x64x8xf32> to vector<1x1x512xf32>
    %c0_6 = arith.constant 0 : index
    %c0_7 = arith.constant 0 : index
    %c0_8 = arith.constant 0 : index
    %24 = vector.load %arg4[%c0_6, %c0_7, %c0_8] : memref<1x1x512xf32, #tpu.memory_space<vmem>>, vector<1x1x512xf32>
    tpu.vector_store %arg4[%c0_6, %c0_7, %c0_8], %23 {strides = array<i32>} : memref<1x1x512xf32, #tpu.memory_space<vmem>>, vector<1x1x512xf32>,
    return
  }
  func.func @transform_0(%arg0: i32) -> (i32, i32, i32) {
    %c0_i32 = arith.constant 0 : i32
    %c0_i32_0 = arith.constant 0 : i32
    %c0_i32_1 = arith.constant 0 : i32
    return %arg0, %c0_i32, %c0_i32_0 : i32, i32, i32
  }
  func.func @transform_1(%arg0: i32) -> (i32, i32) {
    %c0_i32 = arith.constant 0 : i32
    %c0_i32_0 = arith.constant 0 : i32
    %c0_i32_1 = arith.constant 0 : i32
    return %c0_i32, %c0_i32_0 : i32, i32
  }
  func.func @transform_2(%arg0: i32) -> (i32, i32) {
    %c0_i32 = arith.constant 0 : i32
    %c0_i32_0 = arith.constant 0 : i32
    %c0_i32_1 = arith.constant 0 : i32
    return %c0_i32, %c0_i32_0 : i32, i32
  }
  func.func @transform_3(%arg0: i32) -> (i32, i32, i32) {
    %c0_i32 = arith.constant 0 : i32
    %c0_i32_0 = arith.constant 0 : i32
    %c0_i32_1 = arith.constant 0 : i32
    return %arg0, %c0_i32, %c0_i32_0 : i32, i32, i32
  }
}

</mosaic_0001>

<llo_original>
// kernel: tpu_custom_call.1
$region0: #{tpu_custom_call.1}
  #allocation0 [shape = 'u32[]', space=smem, size = 0x4, offset = 0x4, fixed_abs, tag = 'smem constant byte address 0x4 - core index']
  #allocation1 [shape = 'u32[72,128]{1,0:T(1,128)}', space=vmem, size = 0x9000, scoped, tag = 'internal scratch']
  %s0 = inlined_call_operand.vmem [shape: bf16[2,256,36], index: 0, kind: input, shape index: {}]
  %s1 = inlined_call_operand.vmem [shape: bf16[36,8], index: 1, kind: input, shape index: {}]
  %s2 = inlined_call_operand.vmem [shape: f32[1,8], index: 2, kind: input, shape index: {}]
  %s3 = inlined_call_operand.hbm [shape: f32[2,1,512], index: 3, kind: output, shape index: {}]
  %s4 = sld [smem:[#allocation0]]
  $region45: #{tpu_custom_call.1} parent=0
    _
  %s6 = ssub.s32 1, %s4
  %s7 = scalar_select 0, %s6, %s4
  $region1: #{tpu_custom_call.1} parent=0
    #allocation2 [shape = 'u8[4096]{0}', space=vmem, size = 0x1000, scoped, tag = 'output window, operand 0']
    #allocation3 [shape = 's32[2]{0}', space=sflag, size = 0x8, scoped, tag = 'scoped memory for tpu_custom_call.1']
    %8 = vsyncpa [#allocation3], 0
    %s9 = scalar_lea.sflag [#allocation3], 1
    %10 = vsyncpa %s9, 0
    loop: start=0, step=1, limit=4
    $region2: #{tpu_custom_call.1} parent=1 // loop_pre_header
      _
    $region3: #{tpu_custom_call.1} parent=1 // loop_header
      %s12 = sphi 0, %s16
      %p13 = scmp.ge.s32.totalorder %s12, 4
      %s22 = sphi 0, %s24
      %s25 = sphi 0, %s22
      %s26 = sphi 0, %s25
      %s42 = sphi 0, %s26
      %s46 = sphi 0, %s46
      %s48 = sphi 0, %s46
      %s49 = sphi 0, %s48
      %s63 = sphi 0, %s49
      %s67 = sphi 0, %s67
      %s69 = sphi 0, %s67
      %s70 = sphi 0, %s69
      %s84 = sphi 0, %s70
      %s90 = sphi 0, %s92
      %s93 = sphi 0, %s90
      %s94 = sphi 0, %s93
      %s110 = sphi 0, %s94
    $region4: #{tpu_custom_call.1} parent=1 // loop_header_branch
      %15 = sbr.rel (%p13) target = $region8
    $region5: #{tpu_custom_call.1} parent=1 // loop_body
      %s17 = ssub.s32 %s12, 1
      %s18 = ssub.s32 %s12, 2
      %s19 = sadd.s32 %s12, 1
      %s20 = ssub.s32 %s12, %s19
      %p21 = scmp.eq.s32.totalorder %s20, 0
      %s23 = sadd.s32 %s22, 1
      %s24 = scalar_select %p21, %s22, %s23
      %p27 = pneg %p21
      %p28 = scmp.eq.s32.totalorder %s12, 1
      %p29 = por %p27, %p28
      %p30 = scmp.ne.s32.totalorder %s22, %s25
      %p31 = scmp.eq.s32.totalorder %s12, 0
      %p32 = por %p30, %p31
      %p33 = scmp.ne.s32.totalorder %s22, %s25
      %p34 = scmp.eq.s32.totalorder %s17, 1
      %p35 = por %p33, %p34
      %p36 = scmp.ne.s32.totalorder %s25, %s26
      %p37 = scmp.eq.s32.totalorder %s17, 0
      %p38 = por %p36, %p37
      %p39 = scmp.ne.s32.totalorder %s25, %s26
      %p40 = scmp.eq.s32.totalorder %s18, 1
      %p41 = por %p39, %p40
      %p43 = scmp.ne.s32.totalorder %s26, %s42
      %p44 = scmp.eq.s32.totalorder %s18, 0
      %p45 = por %p43, %p44
      %s47 = sadd.s32 %s46, 1
      %p50 = scmp.eq.s32.totalorder %s12, 1
      %p51 = scmp.ne.s32.totalorder %s46, %s48
      %p52 = scmp.eq.s32.totalorder %s12, 0
      %p53 = por %p51, %p52
      %p54 = scmp.ne.s32.totalorder %s46, %s48
      %p55 = scmp.eq.s32.totalorder %s17, 1
      %p56 = por %p54, %p55
      %p57 = scmp.ne.s32.totalorder %s48, %s49
      %p58 = scmp.eq.s32.totalorder %s17, 0
      %p59 = por %p57, %p58
      %p60 = scmp.ne.s32.totalorder %s48, %s49
      %p61 = scmp.eq.s32.totalorder %s18, 1
      %p62 = por %p60, %p61
      %p64 = scmp.ne.s32.totalorder %s49, %s63
      %p65 = scmp.eq.s32.totalorder %s18, 0
      %p66 = por %p64, %p65
      %s68 = sadd.s32 %s67, 1
      %p71 = scmp.eq.s32.totalorder %s12, 1
      %p72 = scmp.ne.s32.totalorder %s67, %s69
      %p73 = scmp.eq.s32.totalorder %s12, 0
      %p74 = por %p72, %p73
      %p75 = scmp.ne.s32.totalorder %s67, %s69
      %p76 = scmp.eq.s32.totalorder %s17, 1
      %p77 = por %p75, %p76
      %p78 = scmp.ne.s32.totalorder %s69, %s70
      %p79 = scmp.eq.s32.totalorder %s17, 0
      %p80 = por %p78, %p79
      %p81 = scmp.ne.s32.totalorder %s69, %s70
      %p82 = scmp.eq.s32.totalorder %s18, 1
      %p83 = por %p81, %p82
      %p85 = scmp.ne.s32.totalorder %s70, %s84
      %p86 = scmp.eq.s32.totalorder %s18, 0
      %p87 = por %p85, %p86
      %s88 = ssub.s32 %s12, %s19
      %p89 = scmp.eq.s32.totalorder %s88, 0
      %s91 = sadd.s32 %s90, 1
      %s92 = scalar_select %p89, %s90, %s91
      %p95 = pneg %p89
      %p96 = scmp.eq.s32.totalorder %s12, 1
      %p97 = por %p95, %p96
      %p98 = scmp.ne.s32.totalorder %s90, %s93
      %p99 = scmp.eq.s32.totalorder %s12, 0
      %p100 = por %p98, %p99
      %p101 = scmp.ne.s32.totalorder %s90, %s93
      %p102 = scmp.eq.s32.totalorder %s17, 1
      %p103 = por %p101, %p102
      %p104 = scmp.ne.s32.totalorder %s93, %s94
      %p105 = scmp.eq.s32.totalorder %s17, 0
      %p106 = por %p104, %p105
      %p107 = scmp.ne.s32.totalorder %s93, %s94
      %p108 = scmp.eq.s32.totalorder %s18, 1
      %p109 = por %p107, %p108
      %p111 = scmp.ne.s32.totalorder %s94, %s110
      %p112 = scmp.eq.s32.totalorder %s18, 0
      %p113 = por %p111, %p112
      %p114 = scmp.le.s32.totalorder 1, %s12
      %p115 = scmp.lt.s32.totalorder %s12, 3
      %p116 = pnand %p114, %p115
      %p117 = pneg %p116
      // Predicated region
      $region9: #{tpu_custom_call.1} parent=5 // pred_check
        _
      $region10: #{tpu_custom_call.1} parent=5 // pred_check_branch
        %119 = sbr.rel (%p116) target = $region12
      $region11: #{tpu_custom_call.1} parent=5 // pred_region
        %s120 = ssub.s32 %s12, 1
        // Predicated region
        $region13: #{tpu_custom_call.1} parent=11 // pred_check
          %p121 = pneg %p59
        $region14: #{tpu_custom_call.1} parent=11 // pred_check_branch
          %123 = sbr.rel (%p121) target = $region16
        $region15: #{tpu_custom_call.1} parent=11 // pred_region
          _
        $region16: #{tpu_custom_call.1} parent=11 // pred_fallthru
          _
        // Predicated region
        $region17: #{tpu_custom_call.1} parent=11 // pred_check
          %p124 = pneg %p80
        $region18: #{tpu_custom_call.1} parent=11 // pred_check_branch
          %126 = sbr.rel (%p124) target = $region20
        $region19: #{tpu_custom_call.1} parent=11 // pred_region
          _
        $region20: #{tpu_custom_call.1} parent=11 // pred_fallthru
          _
      $region12: #{tpu_custom_call.1} parent=5 // pred_fallthru
        _
      %p127 = scmp.lt.s32.totalorder %s12, 2
      // Predicated region
      $region21: #{tpu_custom_call.1} parent=5 // pred_check
        %p128 = pneg %p127
      $region22: #{tpu_custom_call.1} parent=5 // pred_check_branch
        %130 = sbr.rel (%p128) target = $region24
      $region23: #{tpu_custom_call.1} parent=5 // pred_region
        // Predicated region
        $region25: #{tpu_custom_call.1} parent=23 // pred_check
          %p131 = pneg %p32
        $region26: #{tpu_custom_call.1} parent=23 // pred_check_branch
          %133 = sbr.rel (%p131) target = $region28
        $region27: #{tpu_custom_call.1} parent=23 // pred_region
          %p134 = scmp.lt.s32.totalorder %s12, 1
          %s135 = scalar_select %p134, %s12, 1
          %s136 = smul.addr %s135, 32
          %s137 = smul.addr %s136, 4
          %s138 = scalar_lea.vmem %s0, %s137
        $region28: #{tpu_custom_call.1} parent=23 // pred_fallthru
          _
      $region24: #{tpu_custom_call.1} parent=5 // pred_fallthru
        _
      %p139 = scmp.le.s32.totalorder 1, %s12
      %p140 = scmp.lt.s32.totalorder %s12, 3
      %p141 = pnand %p139, %p140
      %p142 = pneg %p141
      // Predicated region
      $region29: #{tpu_custom_call.1} parent=5 // pred_check
        _
      $region30: #{tpu_custom_call.1} parent=5 // pred_check_branch
        %144 = sbr.rel (%p141) target = $region32
      $region31: #{tpu_custom_call.1} parent=5 // pred_region
        %s145 = ssub.s32 %s12, 1
        %p146 = scmp.lt.s32.totalorder %s17, 1
        %s147 = scalar_select %p146, %s17, 1
        %s148 = smul.addr %s147, 32
        %s149 = smul.addr %s148, 4
        %s150 = scalar_lea.vmem %s0, %s149
        %p151 = pneg %p38
        %p152 = pneg %p35
        %p153 = pneg %p59
        %p154 = pneg %p56
        %p155 = pneg %p80
        %p156 = pneg %p77
        %p157 = pneg %p106
        %p158 = pneg %p103
        %s159 = sand.u32 %s93, 1
        %s160 = scalar_lea.sflag [#allocation3], %s159
        %s161 = sand.u32 %s93, 1
        %s162 = smul.addr %s161, 4
        %s163 = scalar_lea.vmem [#allocation2], %s162
        %p164 = scmp.lt.s32.totalorder %s17, 1
        %s165 = scalar_select %p164, %s17, 1
        %s166 = smul.addr %s165, 32
        %s167 = smul.addr %s166, 4
        %s168 = scalar_lea.vmem %s0, %s167
        %v170 = vld [vmem:[%s168] sm:$0xf]
        %v171 = vld [vmem:[%s168 + $0x4] sm:$0xf]
        %v172 = vld [vmem:[%s168 + $0x8] sm:$0xf]
        %v173 = vld [vmem:[%s168 + $0xc] sm:$0xf]
        %v174 = vld [vmem:[%s168 + $0x10] sm:$0xf]
        %v175 = vld [vmem:[%s168 + $0x14] sm:$0xf]
        %v176 = vld [vmem:[%s168 + $0x18] sm:$0xf]
        %v177 = vld [vmem:[%s168 + $0x1c] sm:$0xf]
        %v178 = vld [vmem:[%s168 + $0x20] sm:$0xf]
        %v179 = vld [vmem:[%s168 + $0x24] sm:$0xf]
        %v180 = vld [vmem:[%s168 + $0x28] sm:$0xf]
        %v181 = vld [vmem:[%s168 + $0x2c] sm:$0xf]
        %v182 = vld [vmem:[%s168 + $0x30] sm:$0xf]
        %v183 = vld [vmem:[%s168 + $0x34] sm:$0xf]
        %v184 = vld [vmem:[%s168 + $0x38] sm:$0xf]
        %v185 = vld [vmem:[%s168 + $0x3c] sm:$0xf]
        %v186 = vld [vmem:[%s168 + $0x40] sm:$0xf]
        %v187 = vld [vmem:[%s168 + $0x44] sm:$0xf]
        %v188 = vld [vmem:[%s168 + $0x48] sm:$0xf]
        %v189 = vld [vmem:[%s168 + $0x4c] sm:$0xf]
        %v190 = vld [vmem:[%s168 + $0x50] sm:$0xf]
        %v191 = vld [vmem:[%s168 + $0x54] sm:$0xf]
        %v192 = vld [vmem:[%s168 + $0x58] sm:$0xf]
        %v193 = vld [vmem:[%s168 + $0x5c] sm:$0xf]
        %v194 = vld [vmem:[%s168 + $0x60] sm:$0xf]
        %v195 = vld [vmem:[%s168 + $0x64] sm:$0xf]
        %v196 = vld [vmem:[%s168 + $0x68] sm:$0xf]
        %v197 = vld [vmem:[%s168 + $0x6c] sm:$0xf]
        %v198 = vld [vmem:[%s168 + $0x70] sm:$0xf]
        %v199 = vld [vmem:[%s168 + $0x74] sm:$0xf]
        %v200 = vld [vmem:[%s168 + $0x78] sm:$0xf]
        %v201 = vld [vmem:[%s168 + $0x7c] sm:$0xf]
        %v202 = vld [vmem:[%s1] sm:$0xf]
        %v203 = vld [vmem:[%s1 + $0x4] sm:$0xf]
        %v204 = vld [vmem:[%s1 + $0x8] sm:$0xf]
        %v205 = vld [vmem:[%s1 + $0xc] sm:$0xf]
        %v206 = vld [vmem:[%s1 + $0x10] sm:$0x3]
        %v239 = vunpack.c.l.b16 %v170
        %v240 = vunpack.c.l.b16 %v171
        %v241 = vunpack.c.l.b16 %v172
        %v242 = vunpack.c.l.b16 %v173
        %v243 = vunpack.c.l.b16 %v174
        %v244 = vunpack.c.l.b16 %v175
        %v245 = vunpack.c.l.b16 %v176
        %v246 = vunpack.c.l.b16 %v177
        %v247 = vunpack.c.l.b16 %v178
        %v248 = vunpack.c.l.b16 %v179
        %v249 = vunpack.c.l.b16 %v180
        %v250 = vunpack.c.l.b16 %v181
        %v251 = vunpack.c.l.b16 %v182
        %v252 = vunpack.c.l.b16 %v183
        %v253 = vunpack.c.l.b16 %v184
        %v254 = vunpack.c.l.b16 %v185
        %v255 = vunpack.c.l.b16 %v186
        %v256 = vunpack.c.l.b16 %v187
        %v257 = vunpack.c.l.b16 %v188
        %v258 = vunpack.c.l.b16 %v189
        %v259 = vunpack.c.l.b16 %v190
        %v260 = vunpack.c.l.b16 %v191
        %v261 = vunpack.c.l.b16 %v192
        %v262 = vunpack.c.l.b16 %v193
        %v263 = vunpack.c.l.b16 %v194
        %v264 = vunpack.c.l.b16 %v195
        %v265 = vunpack.c.l.b16 %v196
        %v266 = vunpack.c.l.b16 %v197
        %v267 = vunpack.c.l.b16 %v198
        %v268 = vunpack.c.l.b16 %v199
        %v269 = vunpack.c.l.b16 %v200
        %v270 = vunpack.c.l.b16 %v201
        %v271 = vpack.c.b16 %v240, %v239
        %v272 = vpack.c.b16 %v242, %v241
        %v273 = vpack.c.b16 %v244, %v243
        %v274 = vpack.c.b16 %v246, %v245
        %v275 = vpack.c.b16 %v248, %v247
        %v276 = vpack.c.b16 %v250, %v249
        %v277 = vpack.c.b16 %v252, %v251
        %v278 = vpack.c.b16 %v254, %v253
        %v279 = vpack.c.b16 %v256, %v255
        %v280 = vpack.c.b16 %v258, %v257
        %v281 = vpack.c.b16 %v260, %v259
        %v282 = vpack.c.b16 %v262, %v261
        %v283 = vpack.c.b16 %v264, %v263
        %v284 = vpack.c.b16 %v266, %v265
        %v285 = vpack.c.b16 %v268, %v267
        %v286 = vpack.c.b16 %v270, %v269
        %v292 = vunpack.c.l.b16 %v202
        %v293 = vunpack.c.l.b16 %v203
        %v294 = vunpack.c.l.b16 %v204
        %v295 = vunpack.c.l.b16 %v205
        %v296 = vunpack.c.l.b16 %v206
        %v297 = vpack.c.b16 %v293, %v292
        %v298 = vpack.c.b16 %v295, %v294
        %v299 = vpack.c.b16 %v296, %v296
        %vm302 = vcmask 293888
        %v304 = vsel %vm302, %v271, 0
        %v307 = vsel %vm302, %v272, 0
        %v310 = vsel %vm302, %v273, 0
        %v313 = vsel %vm302, %v274, 0
        %v316 = vsel %vm302, %v275, 0
        %v319 = vsel %vm302, %v276, 0
        %v322 = vsel %vm302, %v277, 0
        %v325 = vsel %vm302, %v278, 0
        %v328 = vsel %vm302, %v279, 0
        %v331 = vsel %vm302, %v280, 0
        %v334 = vsel %vm302, %v281, 0
        %v337 = vsel %vm302, %v282, 0
        %v340 = vsel %vm302, %v283, 0
        %v343 = vsel %vm302, %v284, 0
        %v346 = vsel %vm302, %v285, 0
        %v349 = vsel %vm302, %v286, 0
        %vm351 = vcmask 1041408
        %v353 = vsel %vm351, %v299, 0
        %355 = vmatpush.bf16.msra.mxu0 0
        %356 = vmatpush.bf16.msra.mxu0 0
        %357 = vmatpush.bf16.msra.mxu0 0
        %358 = vmatpush.bf16.msra.mxu0 0
        %359 = vmatpush.bf16.msra.mxu0 0
        %360 = vmatpush.bf16.msra.mxu0 %v353
        %361 = vmatpush.bf16.msra.mxu0 %v298
        %362 = vmatpush.bf16.msra.mxu0 %v297
        %363 = vmatmul.bf16.gmra.mxu0 %v304
        %v364 = vpop.f32.mrf.mxu0
        %v365 = vadd.f32 0.0, %v364
        %v366 = vpop.f32.mrf.mxu0
        %v367 = vadd.f32 0.0, %v366
        %368 = vmatmul.bf16.gmra.mxu0 %v307
        %v369 = vpop.f32.mrf.mxu0
        %v370 = vadd.f32 0.0, %v369
        %v371 = vpop.f32.mrf.mxu0
        %v372 = vadd.f32 0.0, %v371
        %373 = vmatmul.bf16.gmra.mxu0 %v310
        %v374 = vpop.f32.mrf.mxu0
        %v375 = vadd.f32 0.0, %v374
        %v376 = vpop.f32.mrf.mxu0
        %v377 = vadd.f32 0.0, %v376
        %378 = vmatmul.bf16.gmra.mxu0 %v313
        %v379 = vpop.f32.mrf.mxu0
        %v380 = vadd.f32 0.0, %v379
        %v381 = vpop.f32.mrf.mxu0
        %v382 = vadd.f32 0.0, %v381
        %383 = vmatmul.bf16.gmra.mxu0 %v316
        %v384 = vpop.f32.mrf.mxu0
        %v385 = vadd.f32 0.0, %v384
        %v386 = vpop.f32.mrf.mxu0
        %v387 = vadd.f32 0.0, %v386
        %388 = vmatmul.bf16.gmra.mxu0 %v319
        %v389 = vpop.f32.mrf.mxu0
        %v390 = vadd.f32 0.0, %v389
        %v391 = vpop.f32.mrf.mxu0
        %v392 = vadd.f32 0.0, %v391
        %393 = vmatmul.bf16.gmra.mxu0 %v322
        %v394 = vpop.f32.mrf.mxu0
        %v395 = vadd.f32 0.0, %v394
        %v396 = vpop.f32.mrf.mxu0
        %v397 = vadd.f32 0.0, %v396
        %398 = vmatmul.bf16.gmra.mxu0 %v325
        %v399 = vpop.f32.mrf.mxu0
        %v400 = vadd.f32 0.0, %v399
        %v401 = vpop.f32.mrf.mxu0
        %v402 = vadd.f32 0.0, %v401
        %403 = vmatmul.bf16.gmra.mxu0 %v328
        %v404 = vpop.f32.mrf.mxu0
        %v405 = vadd.f32 0.0, %v404
        %v406 = vpop.f32.mrf.mxu0
        %v407 = vadd.f32 0.0, %v406
        %408 = vmatmul.bf16.gmra.mxu0 %v331
        %v409 = vpop.f32.mrf.mxu0
        %v410 = vadd.f32 0.0, %v409
        %v411 = vpop.f32.mrf.mxu0
        %v412 = vadd.f32 0.0, %v411
        %413 = vmatmul.bf16.gmra.mxu0 %v334
        %v414 = vpop.f32.mrf.mxu0
        %v415 = vadd.f32 0.0, %v414
        %v416 = vpop.f32.mrf.mxu0
        %v417 = vadd.f32 0.0, %v416
        %418 = vmatmul.bf16.gmra.mxu0 %v337
        %v419 = vpop.f32.mrf.mxu0
        %v420 = vadd.f32 0.0, %v419
        %v421 = vpop.f32.mrf.mxu0
        %v422 = vadd.f32 0.0, %v421
        %423 = vmatmul.bf16.gmra.mxu0 %v340
        %v424 = vpop.f32.mrf.mxu0
        %v425 = vadd.f32 0.0, %v424
        %v426 = vpop.f32.mrf.mxu0
        %v427 = vadd.f32 0.0, %v426
        %428 = vmatmul.bf16.gmra.mxu0 %v343
        %v429 = vpop.f32.mrf.mxu0
        %v430 = vadd.f32 0.0, %v429
        %v431 = vpop.f32.mrf.mxu0
        %v432 = vadd.f32 0.0, %v431
        %433 = vmatmul.bf16.gmra.mxu0 %v346
        %v434 = vpop.f32.mrf.mxu0
        %v435 = vadd.f32 0.0, %v434
        %v436 = vpop.f32.mrf.mxu0
        %v437 = vadd.f32 0.0, %v436
        %438 = vmatmul.bf16.gmra.mxu0 %v349
        %v439 = vpop.f32.mrf.mxu0
        %v440 = vadd.f32 0.0, %v439
        %v441 = vpop.f32.mrf.mxu0
        %v442 = vadd.f32 0.0, %v441
        %443 = vdwg.mxu0
        %v444 = vmax.f32 %v365, %v385
        %v445 = vmax.f32 %v367, %v387
        %v446 = vmax.f32 %v370, %v390
        %v447 = vmax.f32 %v372, %v392
        %v448 = vmax.f32 %v375, %v395
        %v449 = vmax.f32 %v377, %v397
        %v450 = vmax.f32 %v380, %v400
        %v451 = vmax.f32 %v382, %v402
        %v452 = vmax.f32 %v405, %v425
        %v453 = vmax.f32 %v407, %v427
        %v454 = vmax.f32 %v410, %v430
        %v455 = vmax.f32 %v412, %v432
        %v456 = vmax.f32 %v415, %v435
        %v457 = vmax.f32 %v417, %v437
        %v458 = vmax.f32 %v420, %v440
        %v459 = vmax.f32 %v422, %v442
        %v460 = vmax.f32 %v444, %v452
        %v461 = vmax.f32 %v445, %v453
        %v462 = vmax.f32 %v446, %v454
        %v463 = vmax.f32 %v447, %v455
        %v464 = vmax.f32 %v448, %v456
        %v465 = vmax.f32 %v449, %v457
        %v466 = vmax.f32 %v450, %v458
        %v467 = vmax.f32 %v451, %v459
        %v468 = vld [vmem:[%s2] sm:$0x1]
        %v470 = vperm.slane %v468, 0
        %vm472 = vcmp.ge.f32.partialorder %v460, %v470
        %vm473 = vcmp.ge.f32.partialorder %v461, %v470
        %vm474 = vcmp.ge.f32.partialorder %v462, %v470
        %vm475 = vcmp.ge.f32.partialorder %v463, %v470
        %vm476 = vcmp.ge.f32.partialorder %v464, %v470
        %vm477 = vcmp.ge.f32.partialorder %v465, %v470
        %vm478 = vcmp.ge.f32.partialorder %v466, %v470
        %vm479 = vcmp.ge.f32.partialorder %v467, %v470
        %v480 = vsel %vm472, 1, 0
        %v481 = vsel %vm473, 1, 0
        %v482 = vsel %vm474, 1, 0
        %v483 = vsel %vm475, 1, 0
        %v484 = vsel %vm476, 1, 0
        %v485 = vsel %vm477, 1, 0
        %v486 = vsel %vm478, 1, 0
        %v487 = vsel %vm479, 1, 0
        %v488 = vcvt.s32.f32 %v480
        %v489 = vcvt.s32.f32 %v481
        %v490 = vcvt.s32.f32 %v482
        %v491 = vcvt.s32.f32 %v483
        %v492 = vcvt.s32.f32 %v484
        %v493 = vcvt.s32.f32 %v485
        %v494 = vcvt.s32.f32 %v486
        %v495 = vcvt.s32.f32 %v487
        %v496 = vrot.slane %v488, 4
        %vm497 = vcmask 1047556
        %v498 = vsel %vm497, 0.0, %v496
        %v500 = vunpack.c.l.s4 1983009808
        %v501 = vunpack.c.0.s8 %v500
        %v502 = vperm.slane %v488, %v501
        %v504 = vunpack.c.l.s4 1983009808
        %v505 = vunpack.c.0.s8 %v504
        %v506 = vperm.slane %v498, %v505
        %v507 = vrot.slane %v502, 4
        %v508 = vsel %vm497, 0.0, %v507
        %v510 = vunpack.c.l.s4 1934713408
        %v511 = vunpack.c.0.s8 %v510
        %v512 = vperm.slane %v502, %v511
        %v514 = vunpack.c.l.s4 1934713408
        %v515 = vunpack.c.0.s8 %v514
        %v516 = vperm.slane %v508, %v515
        %v517 = vrot.slane %v506, 4
        %v518 = vsel %vm497, 0.0, %v517
        %v520 = vunpack.c.l.s4 1934713408
        %v521 = vunpack.c.0.s8 %v520
        %v522 = vperm.slane %v506, %v521
        %v524 = vunpack.c.l.s4 1934713408
        %v525 = vunpack.c.0.s8 %v524
        %v526 = vperm.slane %v518, %v525
        %v527 = vrot.slane %v512, 4
        %v528 = vsel %vm497, 0.0, %v527
        %v529 = vrot.slane %v516, 4
        %v530 = vsel %vm497, 0.0, %v529
        %v531 = vrot.slane %v522, 4
        %v532 = vsel %vm497, 0.0, %v531
        %v533 = vrot.slane %v526, 4
        %v534 = vsel %vm497, 0.0, %v533
        %v535 = vrot.slane %v489, 4
        %v536 = vsel %vm497, 0.0, %v535
        %v538 = vunpack.c.l.s4 1983009808
        %v539 = vunpack.c.0.s8 %v538
        %v540 = vperm.slane %v489, %v539
        %v542 = vunpack.c.l.s4 1983009808
        %v543 = vunpack.c.0.s8 %v542
        %v544 = vperm.slane %v536, %v543
        %v545 = vrot.slane %v540, 4
        %v546 = vsel %vm497, 0.0, %v545
        %v548 = vunpack.c.l.s4 1934713408
        %v549 = vunpack.c.0.s8 %v548
        %v550 = vperm.slane %v540, %v549
        %v552 = vunpack.c.l.s4 1934713408
        %v553 = vunpack.c.0.s8 %v552
        %v554 = vperm.slane %v546, %v553
        %v555 = vrot.slane %v544, 4
        %v556 = vsel %vm497, 0.0, %v555
        %v558 = vunpack.c.l.s4 1934713408
        %v559 = vunpack.c.0.s8 %v558
        %v560 = vperm.slane %v544, %v559
        %v562 = vunpack.c.l.s4 1934713408
        %v563 = vunpack.c.0.s8 %v562
        %v564 = vperm.slane %v556, %v563
        %v565 = vrot.slane %v550, 4
        %v566 = vsel %vm497, 0.0, %v565
        %v567 = vrot.slane %v554, 4
        %v568 = vsel %vm497, 0.0, %v567
        %v569 = vrot.slane %v560, 4
        %v570 = vsel %vm497, 0.0, %v569
        %v571 = vrot.slane %v564, 4
        %v572 = vsel %vm497, 0.0, %v571
        %v573 = vrot.slane %v490, 4
        %v574 = vsel %vm497, 0.0, %v573
        %v576 = vunpack.c.l.s4 1983009808
        %v577 = vunpack.c.0.s8 %v576
        %v578 = vperm.slane %v490, %v577
        %v580 = vunpack.c.l.s4 1983009808
        %v581 = vunpack.c.0.s8 %v580
        %v582 = vperm.slane %v574, %v581
        %v583 = vrot.slane %v578, 4
        %v584 = vsel %vm497, 0.0, %v583
        %v586 = vunpack.c.l.s4 1934713408
        %v587 = vunpack.c.0.s8 %v586
        %v588 = vperm.slane %v578, %v587
        %v590 = vunpack.c.l.s4 1934713408
        %v591 = vunpack.c.0.s8 %v590
        %v592 = vperm.slane %v584, %v591
        %v593 = vrot.slane %v582, 4
        %v594 = vsel %vm497, 0.0, %v593
        %v596 = vunpack.c.l.s4 1934713408
        %v597 = vunpack.c.0.s8 %v596
        %v598 = vperm.slane %v582, %v597
        %v600 = vunpack.c.l.s4 1934713408
        %v601 = vunpack.c.0.s8 %v600
        %v602 = vperm.slane %v594, %v601
        %v603 = vrot.slane %v588, 4
        %v604 = vsel %vm497, 0.0, %v603
        %v605 = vrot.slane %v592, 4
        %v606 = vsel %vm497, 0.0, %v605
        %v607 = vrot.slane %v598, 4
        %v608 = vsel %vm497, 0.0, %v607
        %v609 = vrot.slane %v602, 4
        %v610 = vsel %vm497, 0.0, %v609
        %v611 = vrot.slane %v491, 4
        %v612 = vsel %vm497, 0.0, %v611
        %v614 = vunpack.c.l.s4 1983009808
        %v615 = vunpack.c.0.s8 %v614
        %v616 = vperm.slane %v491, %v615
        %v618 = vunpack.c.l.s4 1983009808
        %v619 = vunpack.c.0.s8 %v618
        %v620 = vperm.slane %v612, %v619
        %v621 = vrot.slane %v616, 4
        %v622 = vsel %vm497, 0.0, %v621
        %v624 = vunpack.c.l.s4 1934713408
        %v625 = vunpack.c.0.s8 %v624
        %v626 = vperm.slane %v616, %v625
        %v628 = vunpack.c.l.s4 1934713408
        %v629 = vunpack.c.0.s8 %v628
        %v630 = vperm.slane %v622, %v629
        %v631 = vrot.slane %v620, 4
        %v632 = vsel %vm497, 0.0, %v631
        %v634 = vunpack.c.l.s4 1934713408
        %v635 = vunpack.c.0.s8 %v634
        %v636 = vperm.slane %v620, %v635
        %v638 = vunpack.c.l.s4 1934713408
        %v639 = vunpack.c.0.s8 %v638
        %v640 = vperm.slane %v632, %v639
        %v641 = vrot.slane %v626, 4
        %v642 = vsel %vm497, 0.0, %v641
        %v643 = vrot.slane %v630, 4
        %v644 = vsel %vm497, 0.0, %v643
        %v645 = vrot.slane %v636, 4
        %v646 = vsel %vm497, 0.0, %v645
        %v647 = vrot.slane %v640, 4
        %v648 = vsel %vm497, 0.0, %v647
        %v649 = vrot.slane %v492, 4
        %v650 = vsel %vm497, 0.0, %v649
        %v652 = vunpack.c.l.s4 1983009808
        %v653 = vunpack.c.0.s8 %v652
        %v654 = vperm.slane %v492, %v653
        %v656 = vunpack.c.l.s4 1983009808
        %v657 = vunpack.c.0.s8 %v656
        %v658 = vperm.slane %v650, %v657
        %v659 = vrot.slane %v654, 4
        %v660 = vsel %vm497, 0.0, %v659
        %v662 = vunpack.c.l.s4 1934713408
        %v663 = vunpack.c.0.s8 %v662
        %v664 = vperm.slane %v654, %v663
        %v666 = vunpack.c.l.s4 1934713408
        %v667 = vunpack.c.0.s8 %v666
        %v668 = vperm.slane %v660, %v667
        %v669 = vrot.slane %v658, 4
        %v670 = vsel %vm497, 0.0, %v669
        %v672 = vunpack.c.l.s4 1934713408
        %v673 = vunpack.c.0.s8 %v672
        %v674 = vperm.slane %v658, %v673
        %v676 = vunpack.c.l.s4 1934713408
        %v677 = vunpack.c.0.s8 %v676
        %v678 = vperm.slane %v670, %v677
        %v679 = vrot.slane %v664, 4
        %v680 = vsel %vm497, 0.0, %v679
        %v681 = vrot.slane %v668, 4
        %v682 = vsel %vm497, 0.0, %v681
        %v683 = vrot.slane %v674, 4
        %v684 = vsel %vm497, 0.0, %v683
        %v685 = vrot.slane %v678, 4
        %v686 = vsel %vm497, 0.0, %v685
        %v687 = vrot.slane %v493, 4
        %v688 = vsel %vm497, 0.0, %v687
        %v690 = vunpack.c.l.s4 1983009808
        %v691 = vunpack.c.0.s8 %v690
        %v692 = vperm.slane %v493, %v691
        %v694 = vunpack.c.l.s4 1983009808
        %v695 = vunpack.c.0.s8 %v694
        %v696 = vperm.slane %v688, %v695
        %v697 = vrot.slane %v692, 4
        %v698 = vsel %vm497, 0.0, %v697
        %v700 = vunpack.c.l.s4 1934713408
        %v701 = vunpack.c.0.s8 %v700
        %v702 = vperm.slane %v692, %v701
        %v704 = vunpack.c.l.s4 1934713408
        %v705 = vunpack.c.0.s8 %v704
        %v706 = vperm.slane %v698, %v705
        %v707 = vrot.slane %v696, 4
        %v708 = vsel %vm497, 0.0, %v707
        %v710 = vunpack.c.l.s4 1934713408
        %v711 = vunpack.c.0.s8 %v710
        %v712 = vperm.slane %v696, %v711
        %v714 = vunpack.c.l.s4 1934713408
        %v715 = vunpack.c.0.s8 %v714
        %v716 = vperm.slane %v708, %v715
        %v717 = vrot.slane %v702, 4
        %v718 = vsel %vm497, 0.0, %v717
        %v719 = vrot.slane %v706, 4
        %v720 = vsel %vm497, 0.0, %v719
        %v721 = vrot.slane %v712, 4
        %v722 = vsel %vm497, 0.0, %v721
        %v723 = vrot.slane %v716, 4
        %v724 = vsel %vm497, 0.0, %v723
        %v725 = vrot.slane %v494, 4
        %v726 = vsel %vm497, 0.0, %v725
        %v728 = vunpack.c.l.s4 1983009808
        %v729 = vunpack.c.0.s8 %v728
        %v730 = vperm.slane %v494, %v729
        %v732 = vunpack.c.l.s4 1983009808
        %v733 = vunpack.c.0.s8 %v732
        %v734 = vperm.slane %v726, %v733
        %v735 = vrot.slane %v730, 4
        %v736 = vsel %vm497, 0.0, %v735
        %v738 = vunpack.c.l.s4 1934713408
        %v739 = vunpack.c.0.s8 %v738
        %v740 = vperm.slane %v730, %v739
        %v742 = vunpack.c.l.s4 1934713408
        %v743 = vunpack.c.0.s8 %v742
        %v744 = vperm.slane %v736, %v743
        %v745 = vrot.slane %v734, 4
        %v746 = vsel %vm497, 0.0, %v745
        %v748 = vunpack.c.l.s4 1934713408
        %v749 = vunpack.c.0.s8 %v748
        %v750 = vperm.slane %v734, %v749
        %v752 = vunpack.c.l.s4 1934713408
        %v753 = vunpack.c.0.s8 %v752
        %v754 = vperm.slane %v746, %v753
        %v755 = vrot.slane %v740, 4
        %v756 = vsel %vm497, 0.0, %v755
        %v757 = vrot.slane %v744, 4
        %v758 = vsel %vm497, 0.0, %v757
        %v759 = vrot.slane %v750, 4
        %v760 = vsel %vm497, 0.0, %v759
        %v761 = vrot.slane %v754, 4
        %v762 = vsel %vm497, 0.0, %v761
        %v763 = vrot.slane %v495, 4
        %v764 = vsel %vm497, 0.0, %v763
        %v766 = vunpack.c.l.s4 1983009808
        %v767 = vunpack.c.0.s8 %v766
        %v768 = vperm.slane %v495, %v767
        %v770 = vunpack.c.l.s4 1983009808
        %v771 = vunpack.c.0.s8 %v770
        %v772 = vperm.slane %v764, %v771
        %v773 = vrot.slane %v768, 4
        %v774 = vsel %vm497, 0.0, %v773
        %v776 = vunpack.c.l.s4 1934713408
        %v777 = vunpack.c.0.s8 %v776
        %v778 = vperm.slane %v768, %v777
        %v780 = vunpack.c.l.s4 1934713408
        %v781 = vunpack.c.0.s8 %v780
        %v782 = vperm.slane %v774, %v781
        %v783 = vrot.slane %v772, 4
        %v784 = vsel %vm497, 0.0, %v783
        %v786 = vunpack.c.l.s4 1934713408
        %v787 = vunpack.c.0.s8 %v786
        %v788 = vperm.slane %v772, %v787
        %v790 = vunpack.c.l.s4 1934713408
        %v791 = vunpack.c.0.s8 %v790
        %v792 = vperm.slane %v784, %v791
        %v793 = vrot.slane %v778, 4
        %v794 = vsel %vm497, 0.0, %v793
        %v795 = vrot.slane %v782, 4
        %v796 = vsel %vm497, 0.0, %v795
        %v797 = vrot.slane %v788, 4
        %v798 = vsel %vm497, 0.0, %v797
        %v799 = vrot.slane %v792, 4
        %v800 = vsel %vm497, 0.0, %v799
        %802 = vrot.lane.b32.xlu0 %v528, 8
        %v803 = vpop.permute.xlu0 %802
        %806 = vrot.lane.b32.xlu0 %v516, 16
        %v807 = vpop.permute.xlu0 %806
        %810 = vrot.lane.b32.xlu0 %v530, 24
        %v811 = vpop.permute.xlu0 %810
        %814 = vrot.lane.b32.xlu0 %v522, 32
        %v815 = vpop.permute.xlu0 %814
        %818 = vrot.lane.b32.xlu0 %v532, 40
        %v819 = vpop.permute.xlu0 %818
        %822 = vrot.lane.b32.xlu0 %v526, 48
        %v823 = vpop.permute.xlu0 %822
        %826 = vrot.lane.b32.xlu0 %v534, 56
        %v827 = vpop.permute.xlu0 %826
        %830 = vrot.lane.b32.xlu0 %v550, 64
        %v831 = vpop.permute.xlu0 %830
        %834 = vrot.lane.b32.xlu0 %v566, 72
        %v835 = vpop.permute.xlu0 %834
        %838 = vrot.lane.b32.xlu0 %v554, 80
        %v839 = vpop.permute.xlu0 %838
        %842 = vrot.lane.b32.xlu0 %v568, 88
        %v843 = vpop.permute.xlu0 %842
        %846 = vrot.lane.b32.xlu0 %v560, 96
        %v847 = vpop.permute.xlu0 %846
        %850 = vrot.lane.b32.xlu0 %v570, 104
        %v851 = vpop.permute.xlu0 %850
        %854 = vrot.lane.b32.xlu0 %v564, 112
        %v855 = vpop.permute.xlu0 %854
        %858 = vrot.lane.b32.xlu0 %v572, 120
        %v859 = vpop.permute.xlu0 %858
        %862 = vrot.lane.b32.xlu0 %v604, 8
        %v863 = vpop.permute.xlu0 %862
        %866 = vrot.lane.b32.xlu0 %v592, 16
        %v867 = vpop.permute.xlu0 %866
        %870 = vrot.lane.b32.xlu0 %v606, 24
        %v871 = vpop.permute.xlu0 %870
        %874 = vrot.lane.b32.xlu0 %v598, 32
        %v875 = vpop.permute.xlu0 %874
        %878 = vrot.lane.b32.xlu0 %v608, 40
        %v879 = vpop.permute.xlu0 %878
        %882 = vrot.lane.b32.xlu0 %v602, 48
        %v883 = vpop.permute.xlu0 %882
        %886 = vrot.lane.b32.xlu0 %v610, 56
        %v887 = vpop.permute.xlu0 %886
        %890 = vrot.lane.b32.xlu0 %v626, 64
        %v891 = vpop.permute.xlu0 %890
        %894 = vrot.lane.b32.xlu0 %v642, 72
        %v895 = vpop.permute.xlu0 %894
        %898 = vrot.lane.b32.xlu0 %v630, 80
        %v899 = vpop.permute.xlu0 %898
        %902 = vrot.lane.b32.xlu0 %v644, 88
        %v903 = vpop.permute.xlu0 %902
        %906 = vrot.lane.b32.xlu0 %v636, 96
        %v907 = vpop.permute.xlu0 %906
        %910 = vrot.lane.b32.xlu0 %v646, 104
        %v911 = vpop.permute.xlu0 %910
        %914 = vrot.lane.b32.xlu0 %v640, 112
        %v915 = vpop.permute.xlu0 %914
        %918 = vrot.lane.b32.xlu0 %v648, 120
        %v919 = vpop.permute.xlu0 %918
        %922 = vrot.lane.b32.xlu0 %v680, 8
        %v923 = vpop.permute.xlu0 %922
        %926 = vrot.lane.b32.xlu0 %v668, 16
        %v927 = vpop.permute.xlu0 %926
        %930 = vrot.lane.b32.xlu0 %v682, 24
        %v931 = vpop.permute.xlu0 %930
        %934 = vrot.lane.b32.xlu0 %v674, 32
        %v935 = vpop.permute.xlu0 %934
        %938 = vrot.lane.b32.xlu0 %v684, 40
        %v939 = vpop.permute.xlu0 %938
        %942 = vrot.lane.b32.xlu0 %v678, 48
        %v943 = vpop.permute.xlu0 %942
        %946 = vrot.lane.b32.xlu0 %v686, 56
        %v947 = vpop.permute.xlu0 %946
        %950 = vrot.lane.b32.xlu0 %v702, 64
        %v951 = vpop.permute.xlu0 %950
        %954 = vrot.lane.b32.xlu0 %v718, 72
        %v955 = vpop.permute.xlu0 %954
        %958 = vrot.lane.b32.xlu0 %v706, 80
        %v959 = vpop.permute.xlu0 %958
        %962 = vrot.lane.b32.xlu0 %v720, 88
        %v963 = vpop.permute.xlu0 %962
        %966 = vrot.lane.b32.xlu0 %v712, 96
        %v967 = vpop.permute.xlu0 %966
        %970 = vrot.lane.b32.xlu0 %v722, 104
        %v971 = vpop.permute.xlu0 %970
        %974 = vrot.lane.b32.xlu0 %v716, 112
        %v975 = vpop.permute.xlu0 %974
        %978 = vrot.lane.b32.xlu0 %v724, 120
        %v979 = vpop.permute.xlu0 %978
        %982 = vrot.lane.b32.xlu0 %v756, 8
        %v983 = vpop.permute.xlu0 %982
        %986 = vrot.lane.b32.xlu0 %v744, 16
        %v987 = vpop.permute.xlu0 %986
        %990 = vrot.lane.b32.xlu0 %v758, 24
        %v991 = vpop.permute.xlu0 %990
        %994 = vrot.lane.b32.xlu0 %v750, 32
        %v995 = vpop.permute.xlu0 %994
        %998 = vrot.lane.b32.xlu0 %v760, 40
        %v999 = vpop.permute.xlu0 %998
        %1002 = vrot.lane.b32.xlu0 %v754, 48
        %v1003 = vpop.permute.xlu0 %1002
        %1006 = vrot.lane.b32.xlu0 %v762, 56
        %v1007 = vpop.permute.xlu0 %1006
        %1010 = vrot.lane.b32.xlu0 %v778, 64
        %v1011 = vpop.permute.xlu0 %1010
        %1014 = vrot.lane.b32.xlu0 %v794, 72
        %v1015 = vpop.permute.xlu0 %1014
        %1018 = vrot.lane.b32.xlu0 %v782, 80
        %v1019 = vpop.permute.xlu0 %1018
        %1022 = vrot.lane.b32.xlu0 %v796, 88
        %v1023 = vpop.permute.xlu0 %1022
        %1026 = vrot.lane.b32.xlu0 %v788, 96
        %v1027 = vpop.permute.xlu0 %1026
        %1030 = vrot.lane.b32.xlu0 %v798, 104
        %v1031 = vpop.permute.xlu0 %1030
        %1034 = vrot.lane.b32.xlu0 %v792, 112
        %v1035 = vpop.permute.xlu0 %1034
        %1038 = vrot.lane.b32.xlu0 %v800, 120
        %v1039 = vpop.permute.xlu0 %1038
        %vm1041 = vcmask 64512
        %v1042 = vsel %vm1041, %v512, %v803
        %vm1043 = vcmask 130048
        %v1044 = vsel %vm1043, %v1042, %v807
        %vm1045 = vcmask 195584
        %v1046 = vsel %vm1045, %v1044, %v811
        %vm1047 = vcmask 261120
        %v1048 = vsel %vm1047, %v1046, %v815
        %vm1049 = vcmask 326656
        %v1050 = vsel %vm1049, %v1048, %v819
        %vm1051 = vcmask 392192
        %v1052 = vsel %vm1051, %v1050, %v823
        %vm1053 = vcmask 457728
        %v1054 = vsel %vm1053, %v1052, %v827
        %vm1055 = vcmask 523264
        %v1056 = vsel %vm1055, %v1054, %v831
        %vm1057 = vcmask 588800
        %v1058 = vsel %vm1057, %v1056, %v835
        %vm1059 = vcmask 654336
        %v1060 = vsel %vm1059, %v1058, %v839
        %vm1061 = vcmask 719872
        %v1062 = vsel %vm1061, %v1060, %v843
        %vm1063 = vcmask 785408
        %v1064 = vsel %vm1063, %v1062, %v847
        %vm1065 = vcmask 850944
        %v1066 = vsel %vm1065, %v1064, %v851
        %vm1067 = vcmask 916480
        %v1068 = vsel %vm1067, %v1066, %v855
        %vm1069 = vcmask 982016
        %v1070 = vsel %vm1069, %v1068, %v859
        %v1071 = vsel %vm1041, %v588, %v863
        %v1072 = vsel %vm1043, %v1071, %v867
        %v1073 = vsel %vm1045, %v1072, %v871
        %v1074 = vsel %vm1047, %v1073, %v875
        %v1075 = vsel %vm1049, %v1074, %v879
        %v1076 = vsel %vm1051, %v1075, %v883
        %v1077 = vsel %vm1053, %v1076, %v887
        %v1078 = vsel %vm1055, %v1077, %v891
        %v1079 = vsel %vm1057, %v1078, %v895
        %v1080 = vsel %vm1059, %v1079, %v899
        %v1081 = vsel %vm1061, %v1080, %v903
        %v1082 = vsel %vm1063, %v1081, %v907
        %v1083 = vsel %vm1065, %v1082, %v911
        %v1084 = vsel %vm1067, %v1083, %v915
        %v1085 = vsel %vm1069, %v1084, %v919
        %v1086 = vsel %vm1041, %v664, %v923
        %v1087 = vsel %vm1043, %v1086, %v927
        %v1088 = vsel %vm1045, %v1087, %v931
        %v1089 = vsel %vm1047, %v1088, %v935
        %v1090 = vsel %vm1049, %v1089, %v939
        %v1091 = vsel %vm1051, %v1090, %v943
        %v1092 = vsel %vm1053, %v1091, %v947
        %v1093 = vsel %vm1055, %v1092, %v951
        %v1094 = vsel %vm1057, %v1093, %v955
        %v1095 = vsel %vm1059, %v1094, %v959
        %v1096 = vsel %vm1061, %v1095, %v963
        %v1097 = vsel %vm1063, %v1096, %v967
        %v1098 = vsel %vm1065, %v1097, %v971
        %v1099 = vsel %vm1067, %v1098, %v975
        %v1100 = vsel %vm1069, %v1099, %v979
        %v1101 = vsel %vm1041, %v740, %v983
        %v1102 = vsel %vm1043, %v1101, %v987
        %v1103 = vsel %vm1045, %v1102, %v991
        %v1104 = vsel %vm1047, %v1103, %v995
        %v1105 = vsel %vm1049, %v1104, %v999
        %v1106 = vsel %vm1051, %v1105, %v1003
        %v1107 = vsel %vm1053, %v1106, %v1007
        %v1108 = vsel %vm1055, %v1107, %v1011
        %v1109 = vsel %vm1057, %v1108, %v1015
        %v1110 = vsel %vm1059, %v1109, %v1019
        %v1111 = vsel %vm1061, %v1110, %v1023
        %v1112 = vsel %vm1063, %v1111, %v1027
        %v1113 = vsel %vm1065, %v1112, %v1031
        %v1114 = vsel %vm1067, %v1113, %v1035
        %v1115 = vsel %vm1069, %v1114, %v1039
        %v1120 = vrot.slane %v1085, 7
        %v1121 = vrot.slane %v1100, 6
        %v1122 = vrot.slane %v1115, 5
        %vm1123 = vcmask 1040384
        %v1124 = vsel %vm1123, %v1070, %v1120
        %vm1125 = vcmask 1042434
        %v1126 = vsel %vm1125, %v1121, %v1122
        %v1127 = vsel %vm351, %v1124, %v1126
        %v1129 = vlaneseq
        %vm1130 = vcmp.ge.s32.totalorder %v1129, 0
        %vm1131 = vcmp.lt.s32.totalorder %v1129, 512
        %vm1132 = vmand %vm1130, %vm1131
        %1133 = vst.msk [vmem:[%s163] sm:$0xf] %vm1132, %v1127
        %s1134 = sand.u32 %s93, 1
        %s1135 = scalar_lea.sflag [#allocation3], %s1134
        %s1136 = sand.u32 %s93, 1
        %s1137 = smul.addr %s1136, 4
        %s1138 = scalar_lea.vmem [#allocation2], %s1137
        // Predicated region
        $region33: #{tpu_custom_call.1} parent=31 // pred_check
          %p1139 = pneg %p103
        $region34: #{tpu_custom_call.1} parent=31 // pred_check_branch
          %1141 = sbr.rel (%p1139) target = $region36
        $region35: #{tpu_custom_call.1} parent=31 // pred_region
          %1143 = vsyncadd %s1135, 0
          %s1144 = smul.addr %s17, 4
          %s1145 = scalar_lea.hbm %s3, %s1144
          %s1147 = sshll.u32 %s1138, 4
          %s1148 = int_to_ptr.vmem [resolvable:$true] %s1147
          %s1149 = sshll.u32 %s1145, 4
          %s1150 = int_to_ptr.hbm [resolvable:$true] %s1149
          %1152 = dma.vmem_to_hbm [thread:$0]  %s1148, 64, %s1150, %s1135
        $region36: #{tpu_custom_call.1} parent=31 // pred_fallthru
          _
      $region32: #{tpu_custom_call.1} parent=5 // pred_fallthru
        _
      %p1153 = scmp.le.s32.totalorder 2, %s12
      // Predicated region
      $region37: #{tpu_custom_call.1} parent=5 // pred_check
        %p1154 = pneg %p1153
      $region38: #{tpu_custom_call.1} parent=5 // pred_check_branch
        %1156 = sbr.rel (%p1154) target = $region40
      $region39: #{tpu_custom_call.1} parent=5 // pred_region
        %s1157 = ssub.s32 %s12, 2
        // Predicated region
        $region41: #{tpu_custom_call.1} parent=39 // pred_check
          %p1158 = pneg %p109
        $region42: #{tpu_custom_call.1} parent=39 // pred_check_branch
          %1160 = sbr.rel (%p1158) target = $region44
        $region43: #{tpu_custom_call.1} parent=39 // pred_region
          %s1161 = sand.u32 %s94, 1
          %s1162 = scalar_lea.sflag [#allocation3], %s1161
          %s1163 = sand.u32 %s94, 1
          %s1164 = smul.addr %s1163, 4
          %s1165 = scalar_lea.vmem [#allocation2], %s1164
          %1167 = dma.done %s1162, 64
        $region44: #{tpu_custom_call.1} parent=39 // pred_fallthru
          _
      $region40: #{tpu_custom_call.1} parent=5 // pred_fallthru
        _
    $region6: #{tpu_custom_call.1} parent=1 // loop_footer
      %s16 = sadd.s32 1, %s12
    $region7: #{tpu_custom_call.1} parent=1 // loop_footer_branch
      %11 = sbr.rel target = $region3
    $region8: #{tpu_custom_call.1} parent=1 // loop_exit
      _
    %1168 = vsyncpa [#allocation3], 1
    %s1169 = scalar_lea.sflag [#allocation3], 1
    %1170 = vsyncpa %s1169, 1

</llo_original>
